<compile_context>
chip_gen: v7x
topology: tpu7x:2x2x1
jax: 0.10.0
libtpu: 0.0.40
codegen_flags: <defaults>
</compile_context>

<pallas_src>
import jax
import jax.numpy as jnp
from jax.experimental import pallas as pl
from jax.experimental.pallas import tpu as pltpu


# ---------------------------------------------------------------------------
# Tiling helpers
# ---------------------------------------------------------------------------
def _vmem_capacity_bytes():
    """Per-core VMEM capacity; conservative (v7x-sized) fallback if unknown."""
    try:
        info = pltpu.get_tpu_info()
        for attr in ("vmem_capacity_bytes", "vmem_bytes", "vmem_size_bytes"):
            v = getattr(info, attr, None)
            if isinstance(v, int) and v > 0:
                return v
    except Exception:
        pass
    return 64 * 1024 * 1024  # v7x per-TC VMEM (smallest current generation)


def _tiling_budget():
    """(target elements per channel per block, vmem_limit_bytes)."""
    cap = _vmem_capacity_bytes()
    if cap >= 100 * 1024 * 1024:
        # v5e / v6e: 128 MiB physical VMEM -> big blocks, raise the scoped cap.
        return 4096 * 128, 96 * 1024 * 1024
    # v7x (64 MiB per TC) or unknown: 8 MiB/step, 16 MiB double-buffered.
    return 2048 * 128, 48 * 1024 * 1024


def _spatial_factorization(H, W, max_lanes=8192):
    """Choose a (rows, lanes) 2-D view of the flattened spatial dims.

    Prefers a lane-dense last dim of exactly 128; otherwise searches divisors
    of S = H*W for the lane width with the highest lane occupancy
    LW / (ceil(LW/128)*128)  (always at least as good as plain (H, W))."""
    S = H * W
    if S % 128 == 0:
        return S // 128, 128

    def occ(lw):
        return lw / (((lw + 127) // 128) * 128)

    best_lw = W
    best_occ = occ(W)
    d = 1
    while d * d <= S:
        if S % d == 0:
            for lw in (d, S // d):
                if lw > max_lanes:
                    continue
                o = occ(lw)
                if o > best_occ or (o == best_occ and lw > best_lw):
                    best_occ, best_lw = o, lw
        d += 1
    return S // best_lw, best_lw


def _row_tile(R, LW, target_elems, block_rows=None):
    """Rows per block: multiple of 8 (or full extent R)."""
    t = block_rows if block_rows is not None else max(1, target_elems // LW)
    if t >= R:
        return R                  # full extent (always legal)
    t = max(8, (t // 8) * 8)      # must be a multiple of 8 when not full
    return min(t, R)


def _maybe_split_for_two_cores(R, tR, N):
    """Guarantee >= 2 parallel grid programs when N == 1 (v7x: 2 TCs/chip)."""
    if N > 1 or tR < R or R < 16:
        return tR
    half = (((R + 1) // 2) + 7) // 8 * 8
    if 8 <= half < R:
        return half
    return tR


# ---------------------------------------------------------------------------
# Kernel
# ---------------------------------------------------------------------------
def q_kernel(lam_ref, i_ref, p_ref, l_ref, o_ref):
    # lam_ref: scalar-prefetch SMEM ref, shape (1,), float32
    # i_ref, p_ref: VMEM tiles (1, 3, tR, LW)
    # l_ref, o_ref: VMEM tiles (1, 1, tR, LW)
    lam = lam_ref[0]

    ir = i_ref[0, 0, :, :].astype(jnp.float32)
    ig = i_ref[0, 1, :, :].astype(jnp.float32)
    ib = i_ref[0, 2, :, :].astype(jnp.float32)
    pr = p_ref[0, 0, :, :].astype(jnp.float32)
    pg = p_ref[0, 1, :, :].astype(jnp.float32)
    pb = p_ref[0, 2, :, :].astype(jnp.float32)
    l = l_ref[0, 0, :, :].astype(jnp.float32)

    num = ir * pr + ig * pg + ib * pb + lam * l
    den = pr * pr + pg * pg + pb * pb + lam

    # EUP seed + two Newton-Raphson refinements (~1 ulp, well within 1e-5).
    r = pl.reciprocal(den, approx=True)
    r = r * (2.0 - den * r)
    r = r * (2.0 - den * r)

    o_ref[0, 0, :, :] = (num * r).astype(o_ref.dtype)


def q_forward(I, P, L, lamda, *, block_rows=None):
    """Pallas implementation of module Q:
    (sum_c I_c*P_c + lamda*L) / (sum_c P_c^2 + lamda)."""
    N, C, H, W = I.shape
    assert C == 3, "Q expects 3-channel I and P"
    assert P.shape == (N, 3, H, W)
    assert L.shape == (N, 1, H, W)

    target_elems, vmem_limit = _tiling_budget()
    R, LW = _spatial_factorization(H, W)
    tR = _row_tile(R, LW, target_elems, block_rows)
    tR = _maybe_split_for_two_cores(R, tR, N)

    # Free relabelings of the contiguous spatial elements (no HBM copies).
    I2 = I.reshape(N, 3, R, LW)
    P2 = P.reshape(N, 3, R, LW)
    L2 = L.reshape(N, 1, R, LW)

    lam_arr = jnp.asarray([lamda], dtype=jnp.float32)

    grid = (N, pl.cdiv(R, tR))
    grid_spec = pltpu.PrefetchScalarGridSpec(
        num_scalar_prefetch=1,
        grid=grid,
        in_specs=[
            pl.BlockSpec((1, 3, tR, LW), lambda n, r, lam: (n, 0, r, 0)),
            pl.BlockSpec((1, 3, tR, LW), lambda n, r, lam: (n, 0, r, 0)),
            pl.BlockSpec((1, 1, tR, LW), lambda n, r, lam: (n, 0, r, 0)),
        ],
        out_specs=pl.BlockSpec((1, 1, tR, LW), lambda n, r, lam: (n, 0, r, 0)),
    )

    out = pl.pallas_call(
        q_kernel,
        out_shape=jax.ShapeDtypeStruct((N, 1, R, LW), I.dtype),
        grid_spec=grid_spec,
        compiler_params=pltpu.CompilerParams(
            dimension_semantics=("parallel", "parallel"),
            vmem_limit_bytes=vmem_limit,
        ),
    )(lam_arr, I2, P2, L2)

    return out.reshape(N, 1, H, W)


def q_reference(I, P, L, lamda):
    IR, IG, IB = I[:, 0:1], I[:, 1:2], I[:, 2:3]
    PR, PG, PB = P[:, 0:1], P[:, 1:2], P[:, 2:3]
    return (IR * PR + IG * PG + IB * PB + lamda * L) / (
        PR * PR + PG * PG + PB * PB + lamda
    )


if __name__ == "__main__":
    key = jax.random.PRNGKey(0)
    k_i, k_p, k_l = jax.random.split(key, 3)

    # 1) Main test: small NCHW shapes; S = 256 -> lane-dense (R=2, LW=128) path.
    N, H, W = 2, 16, 16
    I = jax.random.uniform(k_i, (N, 3, H, W), dtype=jnp.float32)
    P = jax.random.uniform(k_p, (N, 3, H, W), dtype=jnp.float32)
    L = jax.random.uniform(k_l, (N, 1, H, W), dtype=jnp.float32)
    lamda = 0.5
    out = q_forward(I, P, L, lamda)
    jax.block_until_ready(out)
    assert out.shape == (N, 1, H, W)
    assert jnp.allclose(out, q_reference(I, P, L, lamda), atol=1e-5, rtol=1e-5)

    # 2) Multi-tile + ragged tail: R=24 rows of 128 lanes, 16-row blocks -> grid (1, 2).
    H2, W2 = 24, 128
    I2 = jax.random.uniform(k_i, (1, 3, H2, W2), dtype=jnp.float32)
    P2 = jax.random.uniform(k_p, (1, 3, H2, W2), dtype=jnp.float32)
    L2 = jax.random.uniform(k_l, (1, 1, H2, W2), dtype=jnp.float32)
    out2 = q_forward(I2, P2, L2, 0.25, block_rows=16)
    jax.block_until_ready(out2)
    assert jnp.allclose(out2, q_reference(I2, P2, L2, 0.25), atol=1e-5, rtol=1e-5)

    # 3) Fallback path: H*W = 120 not divisible by 128 -> divisor search picks
    #    LW=120 (93.7% lane occupancy) instead of W=20.
    H3, W3 = 6, 20
    I3 = jax.random.uniform(k_i, (1, 3, H3, W3), dtype=jnp.float32)
    P3 = jax.random.uniform(k_p, (1, 3, H3, W3), dtype=jnp.float32)
    L3 = jax.random.uniform(k_l, (1, 1, H3, W3), dtype=jnp.float32)
    out3 = q_forward(I3, P3, L3, 1.5)
    jax.block_until_ready(out3)
    assert jnp.allclose(out3, q_reference(I3, P3, L3, 1.5), atol=1e-5, rtol=1e-5)

    # 4) N=1 with work that fits a single block -> automatic split into >= 2
    #    parallel programs (both v7x TensorCores busy): R=64 -> grid (1, 2).
    H4, W4 = 64, 128
    I4 = jax.random.uniform(k_i, (1, 3, H4, W4), dtype=jnp.float32)
    P4 = jax.random.uniform(k_p, (1, 3, H4, W4), dtype=jnp.float32)
    L4 = jax.random.uniform(k_l, (1, 1, H4, W4), dtype=jnp.float32)
    out4 = q_forward(I4, P4, L4, 0.75)
    jax.block_until_ready(out4)
    assert jnp.allclose(out4, q_reference(I4, P4, L4, 0.75), atol=1e-5, rtol=1e-5)

    # 5) bf16 feeding (halves HBM bytes; biggest win on v5e). Looser tolerance
    #    reflects bf16 storage precision; kernel math is still f32.
    H5, W5 = 32, 128
    I5 = jax.random.uniform(k_i, (1, 3, H5, W5), dtype=jnp.float32)
    P5 = jax.random.uniform(k_p, (1, 3, H5, W5), dtype=jnp.float32)
    L5 = jax.random.uniform(k_l, (1, 1, H5, W5), dtype=jnp.float32)
    out5 = q_forward(I5.astype(jnp.bfloat16), P5.astype(jnp.bfloat16),
                     L5.astype(jnp.bfloat16), 0.5)
    jax.block_until_ready(out5)
    ref5 = q_reference(I5.astype(jnp.bfloat16).astype(jnp.float32),
                       P5.astype(jnp.bfloat16).astype(jnp.float32),
                       L5.astype(jnp.bfloat16).astype(jnp.float32), 0.5)
    assert out5.dtype == jnp.bfloat16
    assert jnp.allclose(out5.astype(jnp.float32), ref5, atol=1e-2, rtol=1e-2)

    print("KERNEL_OK")
</pallas_src>

<mosaic_0001>
module attributes {stable_mosaic.version = 11 : i64} {
  func.func @q_kernel(%arg0: i32, %arg1: i32, %arg2: memref<1xf32, #tpu.memory_space<smem>>, %arg3: memref<1x3x2x128xf32, #tpu.memory_space<vmem>>, %arg4: memref<1x3x2x128xf32, #tpu.memory_space<vmem>>, %arg5: memref<1x1x2x128xf32, #tpu.memory_space<vmem>>, %arg6: memref<1x1x2x128xf32, #tpu.memory_space<vmem>>) attributes {dimension_semantics = [#tpu.dimension_semantics<parallel>, #tpu.dimension_semantics<parallel>], iteration_bounds = array<i64: 2, 1>, scalar_prefetch = 1 : i64, scratch_operands = 0 : i64, tpu.core_type = #tpu.core_type<tc>, window_params = [{transform_indices = @transform_0, window_bounds = array<i64: 1, 3, 2, 128>}, {transform_indices = @transform_1, window_bounds = array<i64: 1, 3, 2, 128>}, {transform_indices = @transform_2, window_bounds = array<i64: 1, 1, 2, 128>}, {transform_indices = @transform_3, window_bounds = array<i64: 1, 1, 2, 128>}]} {
    %c0 = arith.constant 0 : index
    %0 = memref.load %arg2[%c0] : memref<1xf32, #tpu.memory_space<smem>>
    %c0_0 = arith.constant 0 : index
    %c0_1 = arith.constant 0 : index
    %c0_2 = arith.constant 0 : index
    %c0_3 = arith.constant 0 : index
    %1 = vector.load %arg3[%c0_0, %c0_1, %c0_2, %c0_3] : memref<1x3x2x128xf32, #tpu.memory_space<vmem>>, vector<1x1x2x128xf32>
    %2 = vector.shape_cast %1 : vector<1x1x2x128xf32> to vector<2x128xf32>
    %c0_4 = arith.constant 0 : index
    %c1 = arith.constant 1 : index
    %c0_5 = arith.constant 0 : index
    %c0_6 = arith.constant 0 : index
    %3 = vector.load %arg3[%c0_4, %c1, %c0_5, %c0_6] : memref<1x3x2x128xf32, #tpu.memory_space<vmem>>, vector<1x1x2x128xf32>
    %4 = vector.shape_cast %3 : vector<1x1x2x128xf32> to vector<2x128xf32>
    %c0_7 = arith.constant 0 : index
    %c2 = arith.constant 2 : index
    %c0_8 = arith.constant 0 : index
    %c0_9 = arith.constant 0 : index
    %5 = vector.load %arg3[%c0_7, %c2, %c0_8, %c0_9] : memref<1x3x2x128xf32, #tpu.memory_space<vmem>>, vector<1x1x2x128xf32>
    %6 = vector.shape_cast %5 : vector<1x1x2x128xf32> to vector<2x128xf32>
    %c0_10 = arith.constant 0 : index
    %c0_11 = arith.constant 0 : index
    %c0_12 = arith.constant 0 : index
    %c0_13 = arith.constant 0 : index
    %7 = vector.load %arg4[%c0_10, %c0_11, %c0_12, %c0_13] : memref<1x3x2x128xf32, #tpu.memory_space<vmem>>, vector<1x1x2x128xf32>
    %8 = vector.shape_cast %7 : vector<1x1x2x128xf32> to vector<2x128xf32>
    %c0_14 = arith.constant 0 : index
    %c1_15 = arith.constant 1 : index
    %c0_16 = arith.constant 0 : index
    %c0_17 = arith.constant 0 : index
    %9 = vector.load %arg4[%c0_14, %c1_15, %c0_16, %c0_17] : memref<1x3x2x128xf32, #tpu.memory_space<vmem>>, vector<1x1x2x128xf32>
    %10 = vector.shape_cast %9 : vector<1x1x2x128xf32> to vector<2x128xf32>
    %c0_18 = arith.constant 0 : index
    %c2_19 = arith.constant 2 : index
    %c0_20 = arith.constant 0 : index
    %c0_21 = arith.constant 0 : index
    %11 = vector.load %arg4[%c0_18, %c2_19, %c0_20, %c0_21] : memref<1x3x2x128xf32, #tpu.memory_space<vmem>>, vector<1x1x2x128xf32>
    %12 = vector.shape_cast %11 : vector<1x1x2x128xf32> to vector<2x128xf32>
    %c0_22 = arith.constant 0 : index
    %c0_23 = arith.constant 0 : index
    %c0_24 = arith.constant 0 : index
    %c0_25 = arith.constant 0 : index
    %13 = vector.load %arg5[%c0_22, %c0_23, %c0_24, %c0_25] : memref<1x1x2x128xf32, #tpu.memory_space<vmem>>, vector<1x1x2x128xf32>
    %14 = vector.shape_cast %13 : vector<1x1x2x128xf32> to vector<2x128xf32>
    %15 = arith.mulf %2, %8 : vector<2x128xf32>
    %16 = arith.mulf %4, %10 : vector<2x128xf32>
    %17 = arith.addf %15, %16 : vector<2x128xf32>
    %18 = arith.mulf %6, %12 : vector<2x128xf32>
    %19 = arith.addf %17, %18 : vector<2x128xf32>
    %20 = vector.broadcast %0 : f32 to vector<2x128xf32>
    %21 = arith.mulf %20, %14 : vector<2x128xf32>
    %22 = arith.addf %19, %21 : vector<2x128xf32>
    %23 = arith.mulf %8, %8 : vector<2x128xf32>
    %24 = arith.mulf %10, %10 : vector<2x128xf32>
    %25 = arith.addf %23, %24 : vector<2x128xf32>
    %26 = arith.mulf %12, %12 : vector<2x128xf32>
    %27 = arith.addf %25, %26 : vector<2x128xf32>
    %28 = vector.broadcast %0 : f32 to vector<2x128xf32>
    %29 = arith.addf %27, %28 : vector<2x128xf32>
    %30 = tpu.reciprocal %29 {approx = true} : vector<2x128xf32> -> vector<2x128xf32>
    %31 = arith.mulf %29, %30 : vector<2x128xf32>
    %cst = arith.constant 2.000000e+00 : f32
    %32 = vector.broadcast %cst : f32 to vector<2x128xf32>
    %33 = arith.subf %32, %31 : vector<2x128xf32>
    %34 = arith.mulf %30, %33 : vector<2x128xf32>
    %35 = arith.mulf %29, %34 : vector<2x128xf32>
    %cst_26 = arith.constant 2.000000e+00 : f32
    %36 = vector.broadcast %cst_26 : f32 to vector<2x128xf32>
    %37 = arith.subf %36, %35 : vector<2x128xf32>
    %38 = arith.mulf %34, %37 : vector<2x128xf32>
    %39 = arith.mulf %22, %38 : vector<2x128xf32>
    %c0_27 = arith.constant 0 : index
    %c0_28 = arith.constant 0 : index
    %c0_29 = arith.constant 0 : index
    %c0_30 = arith.constant 0 : index
    %40 = vector.load %arg6[%c0_27, %c0_28, %c0_29, %c0_30] : memref<1x1x2x128xf32, #tpu.memory_space<vmem>>, vector<1x1x2x128xf32>
    %41 = vector.shape_cast %40 : vector<1x1x2x128xf32> to vector<2x128xf32>
    %42 = vector.shape_cast %39 : vector<2x128xf32> to vector<1x1x2x128xf32>
    tpu.vector_store %arg6[%c0_27, %c0_28, %c0_29, %c0_30], %42 {strides = array<i32>} : memref<1x1x2x128xf32, #tpu.memory_space<vmem>>, vector<1x1x2x128xf32>,
    return
  }
  func.func @transform_0(%arg0: i32, %arg1: i32, %arg2: memref<1xf32, #tpu.memory_space<smem>>) -> (i32, i32, i32, i32) {
    %c0_i32 = arith.constant 0 : i32
    %c0_i32_0 = arith.constant 0 : i32
    %c0_i32_1 = arith.constant 0 : i32
    return %arg0, %c0_i32, %arg1, %c0_i32_0 : i32, i32, i32, i32
  }
  func.func @transform_1(%arg0: i32, %arg1: i32, %arg2: memref<1xf32, #tpu.memory_space<smem>>) -> (i32, i32, i32, i32) {
    %c0_i32 = arith.constant 0 : i32
    %c0_i32_0 = arith.constant 0 : i32
    %c0_i32_1 = arith.constant 0 : i32
    return %arg0, %c0_i32, %arg1, %c0_i32_0 : i32, i32, i32, i32
  }
  func.func @transform_2(%arg0: i32, %arg1: i32, %arg2: memref<1xf32, #tpu.memory_space<smem>>) -> (i32, i32, i32, i32) {
    %c0_i32 = arith.constant 0 : i32
    %c0_i32_0 = arith.constant 0 : i32
    %c0_i32_1 = arith.constant 0 : i32
    return %arg0, %c0_i32, %arg1, %c0_i32_0 : i32, i32, i32, i32
  }
  func.func @transform_3(%arg0: i32, %arg1: i32, %arg2: memref<1xf32, #tpu.memory_space<smem>>) -> (i32, i32, i32, i32) {
    %c0_i32 = arith.constant 0 : i32
    %c0_i32_0 = arith.constant 0 : i32
    %c0_i32_1 = arith.constant 0 : i32
    return %arg0, %c0_i32, %arg1, %c0_i32_0 : i32, i32, i32, i32
  }
}

</mosaic_0001>

<llo_original>
// kernel: tpu_custom_call.1
$region0: #{tpu_custom_call.1}
  #allocation0 [shape = 'u32[]', space=smem, size = 0x4, offset = 0x4, fixed_abs, tag = 'smem constant byte address 0x4 - core index']
  #allocation1 [shape = 'u32[144,128]{1,0:T(1,128)}', space=vmem, size = 0x12000, scoped, tag = 'internal scratch']
  #allocation2 [shape = 's32[1]{0}', space=sflag, size = 0x4, scoped, tag = 'scoped memory for tpu_custom_call.1']
  #allocation3 [shape = 'f32[1]{0:T(128)S(6)}', space=smem, size = 0x200, scoped, tag = 'prefetched SMEM operand 0']
  %s0 = inlined_call_operand.<no memory space> [shape: f32[1], index: 0, kind: input, shape index: {}]
  %s1 = inlined_call_operand.hbm [shape: f32[2,3,2,128], index: 1, kind: input, shape index: {}]
  %s2 = inlined_call_operand.hbm [shape: f32[2,3,2,128], index: 2, kind: input, shape index: {}]
  %s3 = inlined_call_operand.vmem [shape: f32[2,1,2,128], index: 3, kind: input, shape index: {}]
  %s4 = inlined_call_operand.hbm [shape: f32[2,1,2,128], index: 4, kind: output, shape index: {}]
  %s5 = sld [smem:[#allocation0]]
  $region53: #{tpu_custom_call.1} parent=0
    _
  %s7 = ssub.s32 1, %s5
  %s8 = scalar_select 0, %s7, %s5
  %9 = sst [smem:[#allocation3]] %s0
  $region1: #{tpu_custom_call.1} parent=0
    #allocation4 [shape = 'u8[6144]{0}', space=vmem, size = 0x1800, scoped, tag = 'input window, operand 1']
    #allocation5 [shape = 's32[2]{0}', space=sflag, size = 0x8, scoped, tag = 'scoped memory for tpu_custom_call.1']
    #allocation6 [shape = 's32[2]{0}', space=sflag, size = 0x8, scoped, tag = 'scoped memory for tpu_custom_call.1']
    #allocation7 [shape = 'u8[6144]{0}', space=vmem, size = 0x1800, scoped, tag = 'input window, operand 2']
    #allocation8 [shape = 's32[2]{0}', space=sflag, size = 0x8, scoped, tag = 'scoped memory for tpu_custom_call.1']
    #allocation9 [shape = 'u8[2048]{0}', space=vmem, size = 0x800, scoped, tag = 'output window, operand 0']
    %10 = vsyncpa [#allocation5], 0
    %s11 = scalar_lea.sflag [#allocation5], 1
    %12 = vsyncpa %s11, 0
    %13 = vsyncpa [#allocation8], 0
    %s14 = scalar_lea.sflag [#allocation8], 1
    %15 = vsyncpa %s14, 0
    %16 = vsyncpa [#allocation6], 0
    %s17 = scalar_lea.sflag [#allocation6], 1
    %18 = vsyncpa %s17, 0
    loop: start=0, step=1, limit=4
    $region2: #{tpu_custom_call.1} parent=1 // loop_pre_header
      _
    $region3: #{tpu_custom_call.1} parent=1 // loop_header
      %s20 = sphi 0, %s24
      %p21 = scmp.ge.s32.totalorder %s20, 4
      %s27 = sphi 0, %s39
      %s28 = sphi 0, %s35
      %s29 = sphi 0, %s27
      %s30 = sphi 0, %s28
      %s31 = sphi 0, %s29
      %s32 = sphi 0, %s30
      %s44 = sphi 0, %s46
      %s47 = sphi 0, %s44
      %s48 = sphi 0, %s47
      %s64 = sphi 0, %s48
      %s72 = sphi 0, %s74
      %s75 = sphi 0, %s72
      %s76 = sphi 0, %s75
      %s92 = sphi 0, %s76
      %s100 = sphi 0, %s102
      %s103 = sphi 0, %s100
      %s104 = sphi 0, %s103
      %s120 = sphi 0, %s104
      %s128 = sphi 0, %s130
      %s131 = sphi 0, %s128
      %s132 = sphi 0, %s131
      %s148 = sphi 0, %s132
    $region4: #{tpu_custom_call.1} parent=1 // loop_header_branch
      %23 = sbr.rel (%p21) target = $region8
    $region5: #{tpu_custom_call.1} parent=1 // loop_body
      %s25 = ssub.s32 %s20, 1
      %s26 = ssub.s32 %s20, 2
      %s33 = sadd.s32 1, %s28
      %p34 = scmp.ge.s32.totalorder %s33, 1
      %s35 = scalar_select %p34, 0, %s33
      %s36 = sadd.s32 1, %s27
      %s37 = scalar_select %p34, %s36, %s27
      %p38 = scmp.ge.s32.totalorder %s37, 2
      %s39 = scalar_select %p38, 0, %s37
      %s40 = ssub.s32 %s27, %s39
      %s41 = ssub.s32 %s28, %s35
      %s42 = sor.u32 %s40, %s41
      %p43 = scmp.eq.s32.totalorder %s42, 0
      %s45 = sadd.s32 %s44, 1
      %s46 = scalar_select %p43, %s44, %s45
      %p49 = pneg %p43
      %p50 = scmp.eq.s32.totalorder %s20, 1
      %p51 = por %p49, %p50
      %p52 = scmp.ne.s32.totalorder %s44, %s47
      %p53 = scmp.eq.s32.totalorder %s20, 0
      %p54 = por %p52, %p53
      %p55 = scmp.ne.s32.totalorder %s44, %s47
      %p56 = scmp.eq.s32.totalorder %s25, 1
      %p57 = por %p55, %p56
      %p58 = scmp.ne.s32.totalorder %s47, %s48
      %p59 = scmp.eq.s32.totalorder %s25, 0
      %p60 = por %p58, %p59
      %p61 = scmp.ne.s32.totalorder %s47, %s48
      %p62 = scmp.eq.s32.totalorder %s26, 1
      %p63 = por %p61, %p62
      %p65 = scmp.ne.s32.totalorder %s48, %s64
      %p66 = scmp.eq.s32.totalorder %s26, 0
      %p67 = por %p65, %p66
      %s68 = ssub.s32 %s27, %s39
      %s69 = ssub.s32 %s28, %s35
      %s70 = sor.u32 %s68, %s69
      %p71 = scmp.eq.s32.totalorder %s70, 0
      %s73 = sadd.s32 %s72, 1
      %s74 = scalar_select %p71, %s72, %s73
      %p77 = pneg %p71
      %p78 = scmp.eq.s32.totalorder %s20, 1
      %p79 = por %p77, %p78
      %p80 = scmp.ne.s32.totalorder %s72, %s75
      %p81 = scmp.eq.s32.totalorder %s20, 0
      %p82 = por %p80, %p81
      %p83 = scmp.ne.s32.totalorder %s72, %s75
      %p84 = scmp.eq.s32.totalorder %s25, 1
      %p85 = por %p83, %p84
      %p86 = scmp.ne.s32.totalorder %s75, %s76
      %p87 = scmp.eq.s32.totalorder %s25, 0
      %p88 = por %p86, %p87
      %p89 = scmp.ne.s32.totalorder %s75, %s76
      %p90 = scmp.eq.s32.totalorder %s26, 1
      %p91 = por %p89, %p90
      %p93 = scmp.ne.s32.totalorder %s76, %s92
      %p94 = scmp.eq.s32.totalorder %s26, 0
      %p95 = por %p93, %p94
      %s96 = ssub.s32 %s27, %s39
      %s97 = ssub.s32 %s28, %s35
      %s98 = sor.u32 %s96, %s97
      %p99 = scmp.eq.s32.totalorder %s98, 0
      %s101 = sadd.s32 %s100, 1
      %s102 = scalar_select %p99, %s100, %s101
      %p105 = pneg %p99
      %p106 = scmp.eq.s32.totalorder %s20, 1
      %p107 = por %p105, %p106
      %p108 = scmp.ne.s32.totalorder %s100, %s103
      %p109 = scmp.eq.s32.totalorder %s20, 0
      %p110 = por %p108, %p109
      %p111 = scmp.ne.s32.totalorder %s100, %s103
      %p112 = scmp.eq.s32.totalorder %s25, 1
      %p113 = por %p111, %p112
      %p114 = scmp.ne.s32.totalorder %s103, %s104
      %p115 = scmp.eq.s32.totalorder %s25, 0
      %p116 = por %p114, %p115
      %p117 = scmp.ne.s32.totalorder %s103, %s104
      %p118 = scmp.eq.s32.totalorder %s26, 1
      %p119 = por %p117, %p118
      %p121 = scmp.ne.s32.totalorder %s104, %s120
      %p122 = scmp.eq.s32.totalorder %s26, 0
      %p123 = por %p121, %p122
      %s124 = ssub.s32 %s27, %s39
      %s125 = ssub.s32 %s28, %s35
      %s126 = sor.u32 %s124, %s125
      %p127 = scmp.eq.s32.totalorder %s126, 0
      %s129 = sadd.s32 %s128, 1
      %s130 = scalar_select %p127, %s128, %s129
      %p133 = pneg %p127
      %p134 = scmp.eq.s32.totalorder %s20, 1
      %p135 = por %p133, %p134
      %p136 = scmp.ne.s32.totalorder %s128, %s131
      %p137 = scmp.eq.s32.totalorder %s20, 0
      %p138 = por %p136, %p137
      %p139 = scmp.ne.s32.totalorder %s128, %s131
      %p140 = scmp.eq.s32.totalorder %s25, 1
      %p141 = por %p139, %p140
      %p142 = scmp.ne.s32.totalorder %s131, %s132
      %p143 = scmp.eq.s32.totalorder %s25, 0
      %p144 = por %p142, %p143
      %p145 = scmp.ne.s32.totalorder %s131, %s132
      %p146 = scmp.eq.s32.totalorder %s26, 1
      %p147 = por %p145, %p146
      %p149 = scmp.ne.s32.totalorder %s132, %s148
      %p150 = scmp.eq.s32.totalorder %s26, 0
      %p151 = por %p149, %p150
      %p152 = scmp.le.s32.totalorder 1, %s20
      %p153 = scmp.lt.s32.totalorder %s20, 3
      %p154 = pnand %p152, %p153
      %p155 = pneg %p154
      // Predicated region
      $region9: #{tpu_custom_call.1} parent=5 // pred_check
        _
      $region10: #{tpu_custom_call.1} parent=5 // pred_check_branch
        %157 = sbr.rel (%p154) target = $region12
      $region11: #{tpu_custom_call.1} parent=5 // pred_region
        %s158 = ssub.s32 %s20, 1
      $region12: #{tpu_custom_call.1} parent=5 // pred_fallthru
        _
      %p159 = scmp.lt.s32.totalorder %s20, 2
      // Predicated region
      $region13: #{tpu_custom_call.1} parent=5 // pred_check
        %p160 = pneg %p159
      $region14: #{tpu_custom_call.1} parent=5 // pred_check_branch
        %162 = sbr.rel (%p160) target = $region16
      $region15: #{tpu_custom_call.1} parent=5 // pred_region
        // Predicated region
        $region17: #{tpu_custom_call.1} parent=15 // pred_check
          %p163 = pneg %p54
        $region18: #{tpu_custom_call.1} parent=15 // pred_check_branch
          %165 = sbr.rel (%p163) target = $region20
        $region19: #{tpu_custom_call.1} parent=15 // pred_region
          %s166 = sand.u32 %s44, 1
          %s167 = scalar_lea.sflag [#allocation5], %s166
          %s168 = sand.u32 %s44, 1
          %s169 = smul.addr %s168, 6
          %s170 = scalar_lea.vmem [#allocation4], %s169
          %s172 = ssub.s32 96, 96
          %173 = vsyncadd %s167, %s172
          %s174 = smul.addr %s27, 3
          %s175 = sadd.s32 %s28, %s174
          %s176 = smul.addr %s175, 32
          %s177 = scalar_lea.hbm %s1, %s176
          %s178 = sshll.u32 %s170, 4
          %s179 = int_to_ptr.vmem [resolvable:$true] %s178
          %184 = dma.hbm_to_vmem [thread:$0]  %s177, 96, %s179, %s167, 32, 32, 2
        $region20: #{tpu_custom_call.1} parent=15 // pred_fallthru
          _
        // Predicated region
        $region21: #{tpu_custom_call.1} parent=15 // pred_check
          %p185 = pneg %p82
        $region22: #{tpu_custom_call.1} parent=15 // pred_check_branch
          %187 = sbr.rel (%p185) target = $region24
        $region23: #{tpu_custom_call.1} parent=15 // pred_region
          %s188 = sand.u32 %s72, 1
          %s189 = scalar_lea.sflag [#allocation8], %s188
          %s190 = sand.u32 %s72, 1
          %s191 = smul.addr %s190, 6
          %s192 = scalar_lea.vmem [#allocation7], %s191
          %s194 = ssub.s32 96, 96
          %195 = vsyncadd %s189, %s194
          %s196 = smul.addr %s27, 3
          %s197 = sadd.s32 %s28, %s196
          %s198 = smul.addr %s197, 32
          %s199 = scalar_lea.hbm %s2, %s198
          %s200 = sshll.u32 %s192, 4
          %s201 = int_to_ptr.vmem [resolvable:$true] %s200
          %206 = dma.hbm_to_vmem [thread:$0]  %s199, 96, %s201, %s189, 32, 32, 2
        $region24: #{tpu_custom_call.1} parent=15 // pred_fallthru
          _
        // Predicated region
        $region25: #{tpu_custom_call.1} parent=15 // pred_check
          %p207 = pneg %p110
        $region26: #{tpu_custom_call.1} parent=15 // pred_check_branch
          %209 = sbr.rel (%p207) target = $region28
        $region27: #{tpu_custom_call.1} parent=15 // pred_region
          %p210 = scmp.lt.s32.totalorder %s27, 1
          %s211 = scalar_select %p210, %s27, 1
          %p212 = scmp.lt.s32.totalorder %s28, 0
          %s213 = scalar_select %p212, %s28, 0
          %s214 = sadd.s32 %s213, %s211
          %s215 = smul.addr %s214, 2
          %s216 = scalar_lea.vmem %s3, %s215
        $region28: #{tpu_custom_call.1} parent=15 // pred_fallthru
          _
      $region16: #{tpu_custom_call.1} parent=5 // pred_fallthru
        _
      %p217 = scmp.le.s32.totalorder 1, %s20
      %p218 = scmp.lt.s32.totalorder %s20, 3
      %p219 = pnand %p217, %p218
      %p220 = pneg %p219
      // Predicated region
      $region29: #{tpu_custom_call.1} parent=5 // pred_check
        _
      $region30: #{tpu_custom_call.1} parent=5 // pred_check_branch
        %222 = sbr.rel (%p219) target = $region32
      $region31: #{tpu_custom_call.1} parent=5 // pred_region
        %s223 = ssub.s32 %s20, 1
        %s224 = sand.u32 %s47, 1
        %s225 = scalar_lea.sflag [#allocation5], %s224
        %s226 = sand.u32 %s47, 1
        %s227 = smul.addr %s226, 6
        %s228 = scalar_lea.vmem [#allocation4], %s227
        // Predicated region
        $region33: #{tpu_custom_call.1} parent=31 // pred_check
          %p229 = pneg %p60
        $region34: #{tpu_custom_call.1} parent=31 // pred_check_branch
          %231 = sbr.rel (%p229) target = $region36
        $region35: #{tpu_custom_call.1} parent=31 // pred_region
          %232 = dma.done %s225, 96
        $region36: #{tpu_custom_call.1} parent=31 // pred_fallthru
          _
        %s233 = sand.u32 %s75, 1
        %s234 = scalar_lea.sflag [#allocation8], %s233
        %s235 = sand.u32 %s75, 1
        %s236 = smul.addr %s235, 6
        %s237 = scalar_lea.vmem [#allocation7], %s236
        // Predicated region
        $region37: #{tpu_custom_call.1} parent=31 // pred_check
          %p238 = pneg %p88
        $region38: #{tpu_custom_call.1} parent=31 // pred_check_branch
          %240 = sbr.rel (%p238) target = $region40
        $region39: #{tpu_custom_call.1} parent=31 // pred_region
          %241 = dma.done %s234, 96
        $region40: #{tpu_custom_call.1} parent=31 // pred_fallthru
          _
        %s242 = sand.u32 %s47, 1
        %s243 = scalar_lea.sflag [#allocation5], %s242
        %s244 = sand.u32 %s47, 1
        %s245 = smul.addr %s244, 6
        %s246 = scalar_lea.vmem [#allocation4], %s245
        %p247 = pneg %p60
        %p248 = pneg %p57
        %s249 = sand.u32 %s75, 1
        %s250 = scalar_lea.sflag [#allocation8], %s249
        %s251 = sand.u32 %s75, 1
        %s252 = smul.addr %s251, 6
        %s253 = scalar_lea.vmem [#allocation7], %s252
        %p254 = pneg %p88
        %p255 = pneg %p85
        %p256 = scmp.lt.s32.totalorder %s29, 1
        %s257 = scalar_select %p256, %s29, 1
        %p258 = scmp.lt.s32.totalorder %s30, 0
        %s259 = scalar_select %p258, %s30, 0
        %s260 = sadd.s32 %s259, %s257
        %s261 = smul.addr %s260, 2
        %s262 = scalar_lea.vmem %s3, %s261
        %p263 = pneg %p116
        %p264 = pneg %p113
        %p265 = pneg %p144
        %p266 = pneg %p141
        %s267 = sand.u32 %s131, 1
        %s268 = scalar_lea.sflag [#allocation6], %s267
        %s269 = sand.u32 %s131, 1
        %s270 = smul.addr %s269, 2
        %s271 = scalar_lea.vmem [#allocation9], %s270
        %p272 = scmp.lt.s32.totalorder %s29, 1
        %s273 = scalar_select %p272, %s29, 1
        %p274 = scmp.lt.s32.totalorder %s30, 0
        %s275 = scalar_select %p274, %s30, 0
        %s276 = sadd.s32 %s275, %s273
        %s277 = smul.addr %s276, 2
        %s278 = scalar_lea.vmem %s3, %s277
        %s279 = sld [smem:[#allocation3]]
        %v280 = vld [vmem:[%s228] sm:$0x3]
        %s281 = scalar_lea.vmem %s228, 2 [#allocation4]
        %v282 = vld [vmem:[%s281] sm:$0x3]
        %s283 = scalar_lea.vmem %s228, 4 [#allocation4]
        %v284 = vld [vmem:[%s283] sm:$0x3]
        %v285 = vld [vmem:[%s237] sm:$0x3]
        %s286 = scalar_lea.vmem %s237, 2 [#allocation7]
        %v287 = vld [vmem:[%s286] sm:$0x3]
        %s288 = scalar_lea.vmem %s237, 4 [#allocation7]
        %v289 = vld [vmem:[%s288] sm:$0x3]
        %v290 = vld [vmem:[%s278] sm:$0x3]
        %v291 = vmul.f32 %v280, %v285
        %v292 = vmul.f32 %v282, %v287
        %v293 = vadd.f32 %v291, %v292
        %v294 = vmul.f32 %v284, %v289
        %v295 = vadd.f32 %v293, %v294
        %v296 = vstv %s279
        %v297 = vmul.f32 %v296, %v290
        %v298 = vadd.f32 %v295, %v297
        %v299 = vmul.f32 %v285, %v285
        %v300 = vmul.f32 %v287, %v287
        %v301 = vadd.f32 %v299, %v300
        %v302 = vmul.f32 %v289, %v289
        %v303 = vadd.f32 %v301, %v302
        %v304 = vadd.f32 %v303, %v296
        %v305 = vrcp.pop %v304
        %v306 = vmul.f32 %v304, %v305
        %v307 = vsub.f32 2.0, %v306
        %v308 = vmul.f32 %v305, %v307
        %v309 = vmul.f32 %v304, %v308
        %v310 = vsub.f32 2.0, %v309
        %v311 = vmul.f32 %v308, %v310
        %v312 = vmul.f32 %v298, %v311
        %313 = vst [vmem:[%s271] sm:$0x3] %v312
        %s314 = sand.u32 %s131, 1
        %s315 = scalar_lea.sflag [#allocation6], %s314
        %s316 = sand.u32 %s131, 1
        %s317 = smul.addr %s316, 2
        %s318 = scalar_lea.vmem [#allocation9], %s317
        // Predicated region
        $region41: #{tpu_custom_call.1} parent=31 // pred_check
          %p319 = pneg %p141
        $region42: #{tpu_custom_call.1} parent=31 // pred_check_branch
          %321 = sbr.rel (%p319) target = $region44
        $region43: #{tpu_custom_call.1} parent=31 // pred_region
          %s323 = ssub.s32 32, 32
          %324 = vsyncadd %s315, %s323
          %s325 = sadd.s32 %s30, %s29
          %s326 = smul.addr %s325, 32
          %s327 = scalar_lea.hbm %s4, %s326
          %s329 = sshll.u32 %s318, 4
          %s330 = int_to_ptr.vmem [resolvable:$true] %s329
          %332 = dma.vmem_to_hbm [thread:$0]  %s330, 32, %s327, %s315
        $region44: #{tpu_custom_call.1} parent=31 // pred_fallthru
          _
      $region32: #{tpu_custom_call.1} parent=5 // pred_fallthru
        _
      %p333 = scmp.le.s32.totalorder 2, %s20
      // Predicated region
      $region45: #{tpu_custom_call.1} parent=5 // pred_check
        %p334 = pneg %p333
      $region46: #{tpu_custom_call.1} parent=5 // pred_check_branch
        %336 = sbr.rel (%p334) target = $region48
      $region47: #{tpu_custom_call.1} parent=5 // pred_region
        %s337 = ssub.s32 %s20, 2
        // Predicated region
        $region49: #{tpu_custom_call.1} parent=47 // pred_check
          %p338 = pneg %p147
        $region50: #{tpu_custom_call.1} parent=47 // pred_check_branch
          %340 = sbr.rel (%p338) target = $region52
        $region51: #{tpu_custom_call.1} parent=47 // pred_region
          %s341 = sand.u32 %s132, 1
          %s342 = scalar_lea.sflag [#allocation6], %s341
          %s343 = sand.u32 %s132, 1
          %s344 = smul.addr %s343, 2
          %s345 = scalar_lea.vmem [#allocation9], %s344
          %346 = dma.done %s342, 32
        $region52: #{tpu_custom_call.1} parent=47 // pred_fallthru
          _
      $region48: #{tpu_custom_call.1} parent=5 // pred_fallthru
        _
    $region6: #{tpu_custom_call.1} parent=1 // loop_footer
      %s24 = sadd.s32 1, %s20
    $region7: #{tpu_custom_call.1} parent=1 // loop_footer_branch
      %19 = sbr.rel target = $region3
    $region8: #{tpu_custom_call.1} parent=1 // loop_exit
      _
    %347 = vsyncpa [#allocation5], 1
    %s348 = scalar_lea.sflag [#allocation5], 1
    %349 = vsyncpa %s348, 1
    %350 = vsyncpa [#allocation8], 1
    %s351 = scalar_lea.sflag [#allocation8], 1
    %352 = vsyncpa %s351, 1
    %353 = vsyncpa [#allocation6], 1
    %s354 = scalar_lea.sflag [#allocation6], 1
    %355 = vsyncpa %s354, 1

</llo_original>
